<compile_context>
chip_gen: v7x
topology: tpu7x:2x2x1
jax: 0.10.0
libtpu: 0.0.40
codegen_flags: <defaults>
</compile_context>

<pallas_src>
import functools

import jax
import jax.numpy as jnp
from jax.experimental import pallas as pl
from jax.experimental.pallas import tpu as pltpu


def _round_up(v, m):
    return (v + m - 1) // m * m


def _temporal_block_kernel(x_ref, w1_ref, b1_ref, w2_ref, b2_ref, *rest,
                           B, L, PA, pad, dilation, K, Cip, Cop, has_downsample):
    if has_downsample:
        wd_ref, bd_ref, out_ref, xpad_s, h1p_s = rest
    else:
        out_ref, xpad_s, h1p_s = rest

    # ---- causal left pad of x via pre-zeroed VMEM scratch (no concat-with-zeros) ----
    if PA > 0:
        xpad_s[:, 0:PA, :] = jnp.zeros((B, PA, Cip), dtype=xpad_s.dtype)
    xpad_s[:, PA:PA + L, :] = x_ref[...]

    # ---- conv1: fold K dilated taps into the contraction dim -> ONE MXU dot ----
    taps1 = [xpad_s[:, PA - pad + k * dilation: PA - pad + k * dilation + L, :]
             for k in range(K)]
    x_im = jnp.concatenate(taps1, axis=-1).reshape(B * L, K * Cip)          # bf16
    acc1 = jnp.dot(x_im, w1_ref[...], preferred_element_type=jnp.float32)   # (B*L, Cop)
    h1 = jnp.maximum(acc1 + b1_ref[...], 0.0)                               # f32
    # dropout1 = identity at inference

    # ---- conv2 on causally padded h1 (same scratch trick) ----
    if PA > 0:
        h1p_s[:, 0:PA, :] = jnp.zeros((B, PA, Cop), dtype=h1p_s.dtype)
    h1p_s[:, PA:PA + L, :] = h1.reshape(B, L, Cop).astype(h1p_s.dtype)

    taps2 = [h1p_s[:, PA - pad + k * dilation: PA - pad + k * dilation + L, :]
             for k in range(K)]
    h_im = jnp.concatenate(taps2, axis=-1).reshape(B * L, K * Cop)
    acc2 = jnp.dot(h_im, w2_ref[...], preferred_element_type=jnp.float32)
    h2 = jnp.maximum(acc2 + b2_ref[...], 0.0)                               # (B*L, Cop)
    # dropout2 = identity at inference

    # ---- residual path ----
    x_flat = x_ref[...].reshape(B * L, Cip)
    if has_downsample:
        res = jnp.dot(x_flat, wd_ref[...],
                      preferred_element_type=jnp.float32) + bd_ref[...]
    else:
        # identity residual (Cip == Cop): plain VPU add, no wasted MXU pushes / weight DMA
        res = x_flat.astype(jnp.float32)

    # ---- final ReLU; lane-dense (Cop multiple of 128) output store ----
    out_ref[...] = jnp.maximum(h2 + res, 0.0).reshape(B, L, Cop)


def temporal_block(x_ncl, w1_oik, b1, w2_oik, b2, wd_oik, bd,
                   *, kernel_size, dilation, padding, b_tile=8):
    """x_ncl: (N, C_in, L) float32 (PyTorch Conv1d layout). Returns (N, C_out, L) f32.

    Weights are given in PyTorch OIK layout (effective weight-norm weights);
    wd_oik/bd may be None when n_inputs == n_outputs (identity residual).
    """
    N, C_in, L = x_ncl.shape
    K = kernel_size
    C_out = w1_oik.shape[0]
    assert padding == (kernel_size - 1) * dilation, "TCN causal-padding convention"

    has_downsample = wd_oik is not None
    if not has_downsample:
        assert C_in == C_out

    Cip = _round_up(C_in, 128)     # lane-dense input channels
    Cop = _round_up(C_out, 128)    # lane-dense output channels (unmasked stores)
    PA = _round_up(max(padding, 1), 8) if padding > 0 else 0   # sublane-aligned left pad

    # ---- channels-last activations, bf16 matmul operands (f32 accumulation in-kernel) ----
    x_nlc = jnp.transpose(x_ncl, (0, 2, 1)).astype(jnp.bfloat16)           # (N, L, C_in)
    x_nlc = jnp.pad(x_nlc, ((0, 0), (0, 0), (0, Cip - C_in)))              # (N, L, Cip)

    B_TILE = min(b_tile, N)
    n_tiles = -(-N // B_TILE)
    N_pad = n_tiles * B_TILE
    if N_pad != N:
        x_nlc = jnp.pad(x_nlc, ((0, N_pad - N), (0, 0), (0, 0)))

    # ---- tap-folded ("im2col-lite") weight slabs: (K*Cin_pad, Cout_pad), bf16 ----
    # (one-time parameter prep; in a real deployment precompute these once)
    def stack_weight(w_oik, cin, cin_p):
        w = jnp.transpose(w_oik, (2, 1, 0))                                # (K, Cin, Cout)
        w = jnp.pad(w, ((0, 0), (0, cin_p - cin), (0, Cop - C_out)))
        return w.reshape(K * cin_p, Cop).astype(jnp.bfloat16)

    w1_s = stack_weight(w1_oik, C_in, Cip)                                 # (K*Cip, Cop)
    w2_s = stack_weight(w2_oik, C_out, Cop)                                # (K*Cop, Cop)
    b1_p = jnp.pad(b1, (0, Cop - C_out)).reshape(1, Cop).astype(jnp.float32)
    b2_p = jnp.pad(b2, (0, Cop - C_out)).reshape(1, Cop).astype(jnp.float32)

    in_specs = [
        pl.BlockSpec((B_TILE, L, Cip), lambda n: (n, 0, 0)),               # x tile
        pl.BlockSpec((K * Cip, Cop), lambda n: (0, 0)),                    # w1 (stacked)
        pl.BlockSpec((1, Cop), lambda n: (0, 0)),                          # b1
        pl.BlockSpec((K * Cop, Cop), lambda n: (0, 0)),                    # w2 (stacked)
        pl.BlockSpec((1, Cop), lambda n: (0, 0)),                          # b2
    ]
    args = [x_nlc, w1_s, b1_p, w2_s, b2_p]
    if has_downsample:
        wd = jnp.transpose(wd_oik[:, :, 0], (1, 0))                        # (C_in, C_out)
        wd = jnp.pad(wd, ((0, Cip - C_in), (0, Cop - C_out))).astype(jnp.bfloat16)
        bd_p = jnp.pad(bd, (0, Cop - C_out)).reshape(1, Cop).astype(jnp.float32)
        in_specs += [pl.BlockSpec((Cip, Cop), lambda n: (0, 0)),           # downsample w
                     pl.BlockSpec((1, Cop), lambda n: (0, 0))]             # downsample b
        args += [wd, bd_p]

    kernel = functools.partial(
        _temporal_block_kernel, B=B_TILE, L=L, PA=PA, pad=padding,
        dilation=dilation, K=K, Cip=Cip, Cop=Cop, has_downsample=has_downsample)

    out_nlc = pl.pallas_call(
        kernel,
        out_shape=jax.ShapeDtypeStruct((N_pad, L, Cop), jnp.float32),
        grid_spec=pltpu.PrefetchScalarGridSpec(
            num_scalar_prefetch=0,
            grid=(n_tiles,),
            in_specs=in_specs,
            out_specs=pl.BlockSpec((B_TILE, L, Cop), lambda n: (n, 0, 0)),
            scratch_shapes=[
                pltpu.VMEM((B_TILE, PA + L, Cip), jnp.bfloat16),   # causally padded x
                pltpu.VMEM((B_TILE, PA + L, Cop), jnp.bfloat16),   # causally padded h1
            ],
        ),
        compiler_params=pltpu.CompilerParams(
            dimension_semantics=("parallel",),
            vmem_limit_bytes=48 * 1024 * 1024,
        ),
    )(*args)

    return jnp.transpose(out_nlc[:N, :, :C_out], (0, 2, 1))               # (N, C_out, L)


# ----------------------- deterministic parameter setup -----------------------

def weight_norm_effective(v, g):
    """PyTorch weight_norm (dim=0): w[o] = g[o] * v[o] / ||v[o]||_2."""
    norm = jnp.sqrt(jnp.sum(v * v, axis=(1, 2), keepdims=True))
    return g[:, None, None] * v / norm


def make_params(key, n_inputs, n_outputs, kernel_size):
    ks = jax.random.split(key, 6)
    # conv weights in PyTorch OIK layout; weight_norm with g = ||v|| (== init state)
    v1 = 0.01 * jax.random.normal(ks[0], (n_outputs, n_inputs, kernel_size), jnp.float32)
    g1 = jnp.sqrt(jnp.sum(v1 * v1, axis=(1, 2)))
    w1 = weight_norm_effective(v1, g1)
    b1 = 0.05 * jax.random.normal(ks[1], (n_outputs,), jnp.float32)

    v2 = 0.01 * jax.random.normal(ks[2], (n_outputs, n_outputs, kernel_size), jnp.float32)
    g2 = jnp.sqrt(jnp.sum(v2 * v2, axis=(1, 2)))
    w2 = weight_norm_effective(v2, g2)
    b2 = 0.05 * jax.random.normal(ks[3], (n_outputs,), jnp.float32)

    if n_inputs != n_outputs:
        wd = 0.01 * jax.random.normal(ks[4], (n_outputs, n_inputs, 1), jnp.float32)
        bd = 0.05 * jax.random.normal(ks[5], (n_outputs,), jnp.float32)
    else:
        wd, bd = None, None   # identity residual
    return w1, b1, w2, b2, wd, bd


# ------------------------------ pure-JAX reference ----------------------------

def ref_temporal_block(x, w1_oik, b1, w2_oik, b2, wd_oik, bd, *, dilation, padding):
    def conv1d(x, w, b, dil, padd):
        y = jax.lax.conv_general_dilated(
            x, w, window_strides=(1,), padding=[(padd, padd)],
            rhs_dilation=(dil,), dimension_numbers=("NCH", "OIH", "NCH"))
        return y + b[None, :, None]

    out = conv1d(x, w1_oik, b1, dilation, padding)
    out = jnp.maximum(out[:, :, :out.shape[2] - padding], 0.0)   # chomp + relu
    out = conv1d(out, w2_oik, b2, dilation, padding)
    out = jnp.maximum(out[:, :, :out.shape[2] - padding], 0.0)
    res = x if wd_oik is None else conv1d(x, wd_oik, bd, 1, 0)
    return jnp.maximum(out + res, 0.0)


if __name__ == "__main__":
    key = jax.random.PRNGKey(0)

    def run_case(name, N, C_IN, C_OUT, L, KSIZE, DIL, case_key):
        PAD = (KSIZE - 1) * DIL
        kx, kp = jax.random.split(case_key)
        x = jax.random.normal(kx, (N, C_IN, L), jnp.float32)       # NCL (PyTorch layout)
        w1, b1, w2, b2, wd, bd = make_params(kp, C_IN, C_OUT, KSIZE)

        out = temporal_block(x, w1, b1, w2, b2, wd, bd,
                             kernel_size=KSIZE, dilation=DIL, padding=PAD)
        out = jax.block_until_ready(out)

        ref = ref_temporal_block(x, w1, b1, w2, b2, wd, bd, dilation=DIL, padding=PAD)
        assert out.shape == (N, C_OUT, L)
        # bf16 matmul operands with f32 accumulation -> bf16-level tolerance
        assert jnp.allclose(out, ref, rtol=3e-2, atol=3e-2), f"{name}: mismatch vs ref"

    k1, k2 = jax.random.split(key)
    # TCN-style small shapes: kernel_size=3, stride=1, dilation=2, padding=(k-1)*d=4
    run_case("downsample", 2, 4, 8, 16, 3, 2, k1)   # n_inputs != n_outputs -> 1x1 conv res
    run_case("identity",   2, 8, 8, 16, 3, 2, k2)   # n_inputs == n_outputs -> res = x

    print("KERNEL_OK")
</pallas_src>

<mosaic_0001>
module attributes {stable_mosaic.version = 11 : i64} {
  func.func @_temporal_block_kernel(%arg0: i32, %arg1: memref<2x16x128xbf16, #tpu.memory_space<vmem>>, %arg2: memref<384x128xbf16, #tpu.memory_space<vmem>>, %arg3: memref<1x128xf32, #tpu.memory_space<vmem>>, %arg4: memref<384x128xbf16, #tpu.memory_space<vmem>>, %arg5: memref<1x128xf32, #tpu.memory_space<vmem>>, %arg6: memref<128x128xbf16, #tpu.memory_space<vmem>>, %arg7: memref<1x128xf32, #tpu.memory_space<vmem>>, %arg8: memref<2x16x128xf32, #tpu.memory_space<vmem>>, %arg9: memref<2x24x128xbf16, #tpu.memory_space<vmem>>, %arg10: memref<2x24x128xbf16, #tpu.memory_space<vmem>>) attributes {dimension_semantics = [#tpu.dimension_semantics<parallel>], iteration_bounds = array<i64: 1>, scalar_prefetch = 0 : i64, scratch_operands = 2 : i64, tpu.core_type = #tpu.core_type<tc>, window_params = [{transform_indices = @transform_0, window_bounds = array<i64: 2, 16, 128>}, {pipeline_mode = #tpu.pipeline_mode<synchronous>, transform_indices = @transform_1, window_bounds = array<i64: 384, 128>}, {pipeline_mode = #tpu.pipeline_mode<synchronous>, transform_indices = @transform_2, window_bounds = array<i64: 1, 128>}, {pipeline_mode = #tpu.pipeline_mode<synchronous>, transform_indices = @transform_3, window_bounds = array<i64: 384, 128>}, {pipeline_mode = #tpu.pipeline_mode<synchronous>, transform_indices = @transform_4, window_bounds = array<i64: 1, 128>}, {pipeline_mode = #tpu.pipeline_mode<synchronous>, transform_indices = @transform_5, window_bounds = array<i64: 128, 128>}, {pipeline_mode = #tpu.pipeline_mode<synchronous>, transform_indices = @transform_6, window_bounds = array<i64: 1, 128>}, {transform_indices = @transform_7, window_bounds = array<i64: 2, 16, 128>}]} {
    %cst = arith.constant 0.000000e+00 : bf16
    %0 = vector.broadcast %cst : bf16 to vector<2x8x128xbf16>
    %c0 = arith.constant 0 : index
    %c0_0 = arith.constant 0 : index
    %c0_1 = arith.constant 0 : index
    %1 = vector.load %arg9[%c0, %c0_0, %c0_1] : memref<2x24x128xbf16, #tpu.memory_space<vmem>>, vector<2x8x128xbf16>
    tpu.vector_store %arg9[%c0, %c0_0, %c0_1], %0 {strides = array<i32>} : memref<2x24x128xbf16, #tpu.memory_space<vmem>>, vector<2x8x128xbf16>,
    %c0_2 = arith.constant 0 : index
    %c0_3 = arith.constant 0 : index
    %c0_4 = arith.constant 0 : index
    %2 = vector.load %arg1[%c0_2, %c0_3, %c0_4] : memref<2x16x128xbf16, #tpu.memory_space<vmem>>, vector<2x16x128xbf16>
    %c0_5 = arith.constant 0 : index
    %c8 = arith.constant 8 : index
    %c0_6 = arith.constant 0 : index
    %3 = vector.load %arg9[%c0_5, %c8, %c0_6] : memref<2x24x128xbf16, #tpu.memory_space<vmem>>, vector<2x16x128xbf16>
    tpu.vector_store %arg9[%c0_5, %c8, %c0_6], %2 {strides = array<i32>} : memref<2x24x128xbf16, #tpu.memory_space<vmem>>, vector<2x16x128xbf16>,
    %c0_7 = arith.constant 0 : index
    %c4 = arith.constant 4 : index
    %c0_8 = arith.constant 0 : index
    %4 = vector.load %arg9[%c0_7, %c4, %c0_8] : memref<2x24x128xbf16, #tpu.memory_space<vmem>>, vector<2x16x128xbf16>
    %c0_9 = arith.constant 0 : index
    %c6 = arith.constant 6 : index
    %c0_10 = arith.constant 0 : index
    %5 = vector.load %arg9[%c0_9, %c6, %c0_10] : memref<2x24x128xbf16, #tpu.memory_space<vmem>>, vector<2x16x128xbf16>
    %c0_11 = arith.constant 0 : index
    %c8_12 = arith.constant 8 : index
    %c0_13 = arith.constant 0 : index
    %6 = vector.load %arg9[%c0_11, %c8_12, %c0_13] : memref<2x24x128xbf16, #tpu.memory_space<vmem>>, vector<2x16x128xbf16>
    %7 = tpu.concatenate %4, %5, %6 in 2 : vector<2x16x128xbf16>, vector<2x16x128xbf16>, vector<2x16x128xbf16> -> vector<2x16x384xbf16>
    %8 = vector.shape_cast %7 : vector<2x16x384xbf16> to vector<32x384xbf16>
    %c0_14 = arith.constant 0 : index
    %c0_15 = arith.constant 0 : index
    %9 = vector.load %arg2[%c0_14, %c0_15] : memref<384x128xbf16, #tpu.memory_space<vmem>>, vector<384x128xbf16>
    %cst_16 = arith.constant dense<0.000000e+00> : vector<32x128xf32>
    %10 = tpu.matmul %8, %9, %cst_16 {dimension_numbers = #tpu.dot_dimension_numbers<[1], [0], [0], [1], [0, 0, 1, 1], [], []>} : vector<32x384xbf16>, vector<384x128xbf16>, vector<32x128xf32> -> vector<32x128xf32>
    %c0_17 = arith.constant 0 : index
    %c0_18 = arith.constant 0 : index
    %11 = vector.load %arg3[%c0_17, %c0_18] : memref<1x128xf32, #tpu.memory_space<vmem>>, vector<1x128xf32>
    %12 = vector.broadcast %11 : vector<1x128xf32> to vector<32x128xf32>
    %13 = arith.addf %10, %12 : vector<32x128xf32>
    %cst_19 = arith.constant 0.000000e+00 : f32
    %14 = vector.broadcast %cst_19 : f32 to vector<32x128xf32>
    %15 = arith.maximumf %13, %14 : vector<32x128xf32>
    %cst_20 = arith.constant 0.000000e+00 : bf16
    %16 = vector.broadcast %cst_20 : bf16 to vector<2x8x128xbf16>
    %c0_21 = arith.constant 0 : index
    %c0_22 = arith.constant 0 : index
    %c0_23 = arith.constant 0 : index
    %17 = vector.load %arg10[%c0_21, %c0_22, %c0_23] : memref<2x24x128xbf16, #tpu.memory_space<vmem>>, vector<2x8x128xbf16>
    tpu.vector_store %arg10[%c0_21, %c0_22, %c0_23], %16 {strides = array<i32>} : memref<2x24x128xbf16, #tpu.memory_space<vmem>>, vector<2x8x128xbf16>,
    %18 = vector.shape_cast %15 : vector<32x128xf32> to vector<2x16x128xf32>
    %19 = arith.truncf %18 : vector<2x16x128xf32> to vector<2x16x128xbf16>
    %c0_24 = arith.constant 0 : index
    %c8_25 = arith.constant 8 : index
    %c0_26 = arith.constant 0 : index
    %20 = vector.load %arg10[%c0_24, %c8_25, %c0_26] : memref<2x24x128xbf16, #tpu.memory_space<vmem>>, vector<2x16x128xbf16>
    tpu.vector_store %arg10[%c0_24, %c8_25, %c0_26], %19 {strides = array<i32>} : memref<2x24x128xbf16, #tpu.memory_space<vmem>>, vector<2x16x128xbf16>,
    %c0_27 = arith.constant 0 : index
    %c4_28 = arith.constant 4 : index
    %c0_29 = arith.constant 0 : index
    %21 = vector.load %arg10[%c0_27, %c4_28, %c0_29] : memref<2x24x128xbf16, #tpu.memory_space<vmem>>, vector<2x16x128xbf16>
    %c0_30 = arith.constant 0 : index
    %c6_31 = arith.constant 6 : index
    %c0_32 = arith.constant 0 : index
    %22 = vector.load %arg10[%c0_30, %c6_31, %c0_32] : memref<2x24x128xbf16, #tpu.memory_space<vmem>>, vector<2x16x128xbf16>
    %c0_33 = arith.constant 0 : index
    %c8_34 = arith.constant 8 : index
    %c0_35 = arith.constant 0 : index
    %23 = vector.load %arg10[%c0_33, %c8_34, %c0_35] : memref<2x24x128xbf16, #tpu.memory_space<vmem>>, vector<2x16x128xbf16>
    %24 = tpu.concatenate %21, %22, %23 in 2 : vector<2x16x128xbf16>, vector<2x16x128xbf16>, vector<2x16x128xbf16> -> vector<2x16x384xbf16>
    %25 = vector.shape_cast %24 : vector<2x16x384xbf16> to vector<32x384xbf16>
    %c0_36 = arith.constant 0 : index
    %c0_37 = arith.constant 0 : index
    %26 = vector.load %arg4[%c0_36, %c0_37] : memref<384x128xbf16, #tpu.memory_space<vmem>>, vector<384x128xbf16>
    %cst_38 = arith.constant dense<0.000000e+00> : vector<32x128xf32>
    %27 = tpu.matmul %25, %26, %cst_38 {dimension_numbers = #tpu.dot_dimension_numbers<[1], [0], [0], [1], [0, 0, 1, 1], [], []>} : vector<32x384xbf16>, vector<384x128xbf16>, vector<32x128xf32> -> vector<32x128xf32>
    %c0_39 = arith.constant 0 : index
    %c0_40 = arith.constant 0 : index
    %28 = vector.load %arg5[%c0_39, %c0_40] : memref<1x128xf32, #tpu.memory_space<vmem>>, vector<1x128xf32>
    %29 = vector.broadcast %28 : vector<1x128xf32> to vector<32x128xf32>
    %30 = arith.addf %27, %29 : vector<32x128xf32>
    %cst_41 = arith.constant 0.000000e+00 : f32
    %31 = vector.broadcast %cst_41 : f32 to vector<32x128xf32>
    %32 = arith.maximumf %30, %31 : vector<32x128xf32>
    %c0_42 = arith.constant 0 : index
    %c0_43 = arith.constant 0 : index
    %c0_44 = arith.constant 0 : index
    %33 = vector.load %arg1[%c0_42, %c0_43, %c0_44] : memref<2x16x128xbf16, #tpu.memory_space<vmem>>, vector<2x16x128xbf16>
    %34 = vector.shape_cast %33 : vector<2x16x128xbf16> to vector<32x128xbf16>
    %c0_45 = arith.constant 0 : index
    %c0_46 = arith.constant 0 : index
    %35 = vector.load %arg6[%c0_45, %c0_46] : memref<128x128xbf16, #tpu.memory_space<vmem>>, vector<128x128xbf16>
    %cst_47 = arith.constant dense<0.000000e+00> : vector<32x128xf32>
    %36 = tpu.matmul %34, %35, %cst_47 {dimension_numbers = #tpu.dot_dimension_numbers<[1], [0], [0], [1], [0, 0, 1, 1], [], []>} : vector<32x128xbf16>, vector<128x128xbf16>, vector<32x128xf32> -> vector<32x128xf32>
    %c0_48 = arith.constant 0 : index
    %c0_49 = arith.constant 0 : index
    %37 = vector.load %arg7[%c0_48, %c0_49] : memref<1x128xf32, #tpu.memory_space<vmem>>, vector<1x128xf32>
    %38 = vector.broadcast %37 : vector<1x128xf32> to vector<32x128xf32>
    %39 = arith.addf %36, %38 : vector<32x128xf32>
    %40 = arith.addf %32, %39 : vector<32x128xf32>
    %cst_50 = arith.constant 0.000000e+00 : f32
    %41 = vector.broadcast %cst_50 : f32 to vector<32x128xf32>
    %42 = arith.maximumf %40, %41 : vector<32x128xf32>
    %43 = vector.shape_cast %42 : vector<32x128xf32> to vector<2x16x128xf32>
    %c0_51 = arith.constant 0 : index
    %c0_52 = arith.constant 0 : index
    %c0_53 = arith.constant 0 : index
    %44 = vector.load %arg8[%c0_51, %c0_52, %c0_53] : memref<2x16x128xf32, #tpu.memory_space<vmem>>, vector<2x16x128xf32>
    tpu.vector_store %arg8[%c0_51, %c0_52, %c0_53], %43 {strides = array<i32>} : memref<2x16x128xf32, #tpu.memory_space<vmem>>, vector<2x16x128xf32>,
    return
  }
  func.func @transform_0(%arg0: i32) -> (i32, i32, i32) {
    %c0_i32 = arith.constant 0 : i32
    %c0_i32_0 = arith.constant 0 : i32
    %c0_i32_1 = arith.constant 0 : i32
    return %arg0, %c0_i32, %c0_i32_0 : i32, i32, i32
  }
  func.func @transform_1(%arg0: i32) -> (i32, i32) {
    %c0_i32 = arith.constant 0 : i32
    %c0_i32_0 = arith.constant 0 : i32
    %c0_i32_1 = arith.constant 0 : i32
    return %c0_i32, %c0_i32_0 : i32, i32
  }
  func.func @transform_2(%arg0: i32) -> (i32, i32) {
    %c0_i32 = arith.constant 0 : i32
    %c0_i32_0 = arith.constant 0 : i32
    %c0_i32_1 = arith.constant 0 : i32
    return %c0_i32, %c0_i32_0 : i32, i32
  }
  func.func @transform_3(%arg0: i32) -> (i32, i32) {
    %c0_i32 = arith.constant 0 : i32
    %c0_i32_0 = arith.constant 0 : i32
    %c0_i32_1 = arith.constant 0 : i32
    return %c0_i32, %c0_i32_0 : i32, i32
  }
  func.func @transform_4(%arg0: i32) -> (i32, i32) {
    %c0_i32 = arith.constant 0 : i32
    %c0_i32_0 = arith.constant 0 : i32
    %c0_i32_1 = arith.constant 0 : i32
    return %c0_i32, %c0_i32_0 : i32, i32
  }
  func.func @transform_5(%arg0: i32) -> (i32, i32) {
    %c0_i32 = arith.constant 0 : i32
    %c0_i32_0 = arith.constant 0 : i32
    %c0_i32_1 = arith.constant 0 : i32
    return %c0_i32, %c0_i32_0 : i32, i32
  }
  func.func @transform_6(%arg0: i32) -> (i32, i32) {
    %c0_i32 = arith.constant 0 : i32
    %c0_i32_0 = arith.constant 0 : i32
    %c0_i32_1 = arith.constant 0 : i32
    return %c0_i32, %c0_i32_0 : i32, i32
  }
  func.func @transform_7(%arg0: i32) -> (i32, i32, i32) {
    %c0_i32 = arith.constant 0 : i32
    %c0_i32_0 = arith.constant 0 : i32
    %c0_i32_1 = arith.constant 0 : i32
    return %arg0, %c0_i32, %c0_i32_0 : i32, i32, i32
  }
}

</mosaic_0001>

<llo_original>
// kernel: tpu_custom_call.1
$region0: #{tpu_custom_call.1}
  #allocation0 [shape = 'u32[]', space=smem, size = 0x4, offset = 0x4, fixed_abs, tag = 'smem constant byte address 0x4 - core index']
  #allocation1 [shape = 'u32[144,128]{1,0:T(1,128)}', space=vmem, size = 0x12000, scoped, tag = 'internal scratch']
  #allocation2 [shape = 'bf16[2,24,128]{2,1,0:T(8,128)(2,1)}', space=vmem, size = 0x3000, scoped, tag = 'scratch operand']
  #allocation3 [shape = 'bf16[2,24,128]{2,1,0:T(8,128)(2,1)}', space=vmem, size = 0x3000, scoped, tag = 'scratch operand']
  %s0 = inlined_call_operand.hbm [shape: bf16[2,16,128], index: 0, kind: input, shape index: {}]
  %s1 = inlined_call_operand.hbm [shape: bf16[384,128], index: 1, kind: input, shape index: {}]
  %s2 = inlined_call_operand.vmem [shape: f32[1,128], index: 2, kind: input, shape index: {}]
  %s3 = inlined_call_operand.hbm [shape: bf16[384,128], index: 3, kind: input, shape index: {}]
  %s4 = inlined_call_operand.vmem [shape: f32[1,128], index: 4, kind: input, shape index: {}]
  %s5 = inlined_call_operand.hbm [shape: bf16[128,128], index: 5, kind: input, shape index: {}]
  %s6 = inlined_call_operand.vmem [shape: f32[1,128], index: 6, kind: input, shape index: {}]
  %s7 = inlined_call_operand.hbm [shape: f32[2,16,128], index: 7, kind: output, shape index: {}]
  %s8 = sld [smem:[#allocation0]]
  $region54: #{tpu_custom_call.1} parent=0
    _
  %s10 = ssub.s32 1, %s8
  %s11 = scalar_select 0, %s10, %s8
  $region1: #{tpu_custom_call.1} parent=0
    #allocation4 [shape = 'u8[8192]{0}', space=vmem, size = 0x2000, scoped, tag = 'input window, operand 0, single buffered']
    #allocation5 [shape = 's32[1]{0}', space=sflag, size = 0x4, scoped, tag = 'scoped memory for tpu_custom_call.1']
    #allocation6 [shape = 's32[1]{0}', space=sflag, size = 0x4, scoped, tag = 'scoped memory for tpu_custom_call.1']
    #allocation7 [shape = 'u8[98304]{0}', space=vmem, size = 0x18000, scoped, tag = 'input window, operand 1, single buffered']
    #allocation8 [shape = 's32[1]{0}', space=sflag, size = 0x4, scoped, tag = 'scoped memory for tpu_custom_call.1']
    #allocation9 [shape = 'u8[98304]{0}', space=vmem, size = 0x18000, scoped, tag = 'input window, operand 3, single buffered']
    #allocation10 [shape = 'u8[32768]{0}', space=vmem, size = 0x8000, scoped, tag = 'input window, operand 5, single buffered']
    #allocation11 [shape = 's32[1]{0}', space=sflag, size = 0x4, scoped, tag = 'scoped memory for tpu_custom_call.1']
    #allocation12 [shape = 'u8[16384]{0}', space=vmem, size = 0x4000, scoped, tag = 'output window, operand 0, single buffered']
    %12 = vsyncpa [#allocation5], 0
    %13 = vsyncpa [#allocation8], 0
    %14 = vsyncpa [#allocation11], 0
    %15 = vsyncpa [#allocation6], 0
    // Predicated region
    $region2: #{tpu_custom_call.1} parent=1 // pred_check
      _
    $region3: #{tpu_custom_call.1} parent=1 // pred_check_branch
      %17 = sbr.rel (0) target = $region5
    $region4: #{tpu_custom_call.1} parent=1 // pred_region
      %s19 = ssub.s32 256, 256
      %20 = vsyncadd [#allocation5], %s19
      %s21 = sshll.u32 [#allocation4], 4
      %s22 = int_to_ptr.vmem [resolvable:$true] %s21
      %27 = dma.hbm_to_vmem [thread:$0]  %s0, 256, %s22, [#allocation5], 64, 64, 4
    $region5: #{tpu_custom_call.1} parent=1 // pred_fallthru
      _
    // Predicated region
    $region6: #{tpu_custom_call.1} parent=1 // pred_check
      _
    $region7: #{tpu_custom_call.1} parent=1 // pred_check_branch
      %29 = sbr.rel (0) target = $region9
    $region8: #{tpu_custom_call.1} parent=1 // pred_region
      %s31 = ssub.s32 3072, 3072
      %32 = vsyncadd [#allocation8], %s31
      %s33 = sshll.u32 [#allocation7], 4
      %s34 = int_to_ptr.vmem [resolvable:$true] %s33
      %39 = dma.hbm_to_vmem [thread:$0]  %s1, 3072, %s34, [#allocation8], 64, 64, 4
    $region9: #{tpu_custom_call.1} parent=1 // pred_fallthru
      _
    // Predicated region
    $region10: #{tpu_custom_call.1} parent=1 // pred_check
      _
    $region11: #{tpu_custom_call.1} parent=1 // pred_check_branch
      %41 = sbr.rel (0) target = $region13
    $region12: #{tpu_custom_call.1} parent=1 // pred_region
      _
    $region13: #{tpu_custom_call.1} parent=1 // pred_fallthru
      _
    // Predicated region
    $region14: #{tpu_custom_call.1} parent=1 // pred_check
      _
    $region15: #{tpu_custom_call.1} parent=1 // pred_check_branch
      %43 = sbr.rel (0) target = $region17
    $region16: #{tpu_custom_call.1} parent=1 // pred_region
      %s45 = ssub.s32 3072, 3072
      %46 = vsyncadd [#allocation8], %s45
      %s47 = sshll.u32 [#allocation9], 4
      %s48 = int_to_ptr.vmem [resolvable:$true] %s47
      %53 = dma.hbm_to_vmem [thread:$0]  %s3, 3072, %s48, [#allocation8], 64, 64, 4
    $region17: #{tpu_custom_call.1} parent=1 // pred_fallthru
      _
    // Predicated region
    $region18: #{tpu_custom_call.1} parent=1 // pred_check
      _
    $region19: #{tpu_custom_call.1} parent=1 // pred_check_branch
      %55 = sbr.rel (0) target = $region21
    $region20: #{tpu_custom_call.1} parent=1 // pred_region
      _
    $region21: #{tpu_custom_call.1} parent=1 // pred_fallthru
      _
    // Predicated region
    $region22: #{tpu_custom_call.1} parent=1 // pred_check
      _
    $region23: #{tpu_custom_call.1} parent=1 // pred_check_branch
      %57 = sbr.rel (0) target = $region25
    $region24: #{tpu_custom_call.1} parent=1 // pred_region
      %s59 = ssub.s32 1024, 1024
      %60 = vsyncadd [#allocation11], %s59
      %s61 = sshll.u32 [#allocation10], 4
      %s62 = int_to_ptr.vmem [resolvable:$true] %s61
      %67 = dma.hbm_to_vmem [thread:$0]  %s5, 1024, %s62, [#allocation11], 64, 64, 4
    $region25: #{tpu_custom_call.1} parent=1 // pred_fallthru
      _
    // Predicated region
    $region26: #{tpu_custom_call.1} parent=1 // pred_check
      _
    $region27: #{tpu_custom_call.1} parent=1 // pred_check_branch
      %69 = sbr.rel (0) target = $region29
    $region28: #{tpu_custom_call.1} parent=1 // pred_region
      _
    $region29: #{tpu_custom_call.1} parent=1 // pred_fallthru
      _
    // Predicated region
    $region30: #{tpu_custom_call.1} parent=1 // pred_check
      _
    $region31: #{tpu_custom_call.1} parent=1 // pred_check_branch
      %71 = sbr.rel (0) target = $region33
    $region32: #{tpu_custom_call.1} parent=1 // pred_region
      %72 = dma.done [#allocation5], 256
    $region33: #{tpu_custom_call.1} parent=1 // pred_fallthru
      _
    // Predicated region
    $region34: #{tpu_custom_call.1} parent=1 // pred_check
      _
    $region35: #{tpu_custom_call.1} parent=1 // pred_check_branch
      %74 = sbr.rel (0) target = $region37
    $region36: #{tpu_custom_call.1} parent=1 // pred_region
      %75 = dma.done [#allocation8], 3072
    $region37: #{tpu_custom_call.1} parent=1 // pred_fallthru
      _
    // Predicated region
    $region38: #{tpu_custom_call.1} parent=1 // pred_check
      _
    $region39: #{tpu_custom_call.1} parent=1 // pred_check_branch
      %77 = sbr.rel (0) target = $region41
    $region40: #{tpu_custom_call.1} parent=1 // pred_region
      %78 = dma.done [#allocation8], 3072
    $region41: #{tpu_custom_call.1} parent=1 // pred_fallthru
      _
    // Predicated region
    $region42: #{tpu_custom_call.1} parent=1 // pred_check
      _
    $region43: #{tpu_custom_call.1} parent=1 // pred_check_branch
      %80 = sbr.rel (0) target = $region45
    $region44: #{tpu_custom_call.1} parent=1 // pred_region
      %81 = dma.done [#allocation11], 1024
    $region45: #{tpu_custom_call.1} parent=1 // pred_fallthru
      _
    %83 = vst [vmem:[#allocation2] sm:$0xf] 0
    %84 = vst [vmem:[#allocation2 + $0xc] sm:$0xf] 0
    %v85 = vld [vmem:[#allocation4] sm:$0xf]
    %v86 = vld [vmem:[#allocation4 + $0x4] sm:$0xf]
    %v87 = vld [vmem:[#allocation4 + $0x8] sm:$0xf]
    %v88 = vld [vmem:[#allocation4 + $0xc] sm:$0xf]
    %89 = vst [vmem:[#allocation2 + $0x4] sm:$0xf] %v85
    %90 = vst [vmem:[#allocation2 + $0x8] sm:$0xf] %v86
    %91 = vst [vmem:[#allocation2 + $0x10] sm:$0xf] %v87
    %92 = vst [vmem:[#allocation2 + $0x14] sm:$0xf] %v88
    %v93 = vld [vmem:[#allocation2] sm:$0xc]
    %v94 = vld [vmem:[#allocation2 + $0x4] sm:$0xf]
    %v95 = vld [vmem:[#allocation2 + $0x8] sm:$0x3]
    %v96 = vld [vmem:[#allocation2 + $0xc] sm:$0xc]
    %v97 = vld [vmem:[#allocation2 + $0x10] sm:$0xf]
    %v98 = vld [vmem:[#allocation2 + $0x14] sm:$0x3]
    %v99 = vld [vmem:[#allocation2] sm:$0x8]
    %v100 = vld [vmem:[#allocation2 + $0x8] sm:$0x7]
    %v101 = vld [vmem:[#allocation2 + $0xc] sm:$0x8]
    %v102 = vld [vmem:[#allocation2 + $0x14] sm:$0x7]
    %v103 = vld [vmem:[#allocation2 + $0x8] sm:$0xf]
    %v104 = vld [vmem:[#allocation2 + $0x14] sm:$0xf]
    %v111 = vunpack.c.l.b16 %v93
    %v112 = vunpack.c.l.b16 %v94
    %v113 = vunpack.c.l.b16 %v95
    %v114 = vunpack.c.l.b16 %v96
    %v115 = vunpack.c.l.b16 %v97
    %v116 = vunpack.c.l.b16 %v98
    %v117 = vpack.c.b16 %v112, %v111
    %v118 = vpack.c.b16 %v113, %v113
    %v119 = vpack.c.b16 %v115, %v114
    %v120 = vpack.c.b16 %v116, %v116
    %v125 = vunpack.c.l.b16 %v99
    %v126 = vunpack.c.l.b16 %v100
    %v127 = vunpack.c.l.b16 %v101
    %v128 = vunpack.c.l.b16 %v102
    %v129 = vpack.c.b16 %v112, %v125
    %v130 = vpack.c.b16 %v126, %v126
    %v131 = vpack.c.b16 %v115, %v127
    %v132 = vpack.c.b16 %v128, %v128
    %vm133 = vcmask 1046528
    %v134 = vrot.slane %v129, 1
    %v135 = vrot.slane %v130, 1
    %v136 = vsel %vm133, %v134, %v135
    %v137 = vrot.slane %v131, 1
    %v138 = vrot.slane %v132, 1
    %v139 = vsel %vm133, %v137, %v138
    %v142 = vunpack.c.l.b16 %v103
    %v143 = vunpack.c.l.b16 %v104
    %v144 = vpack.c.b16 %v142, %v112
    %v145 = vpack.c.b16 %v143, %v115
    %v146 = vrot.slane %v144, 6
    %v147 = vrot.slane %v145, 6
    %vm148 = vcmask 1045504
    %v149 = vrot.slane %v117, 2
    %v150 = vrot.slane %v118, 2
    %v151 = vsel %vm148, %v149, %v150
    %v152 = vrot.slane %v136, 2
    %v153 = vrot.slane %v135, 2
    %v154 = vsel %vm148, %v152, %v153
    %v155 = vrot.slane %v146, 2
    %v156 = vsel %vm148, %v155, %v155
    %v157 = vrot.slane %v119, 2
    %v158 = vrot.slane %v120, 2
    %v159 = vsel %vm148, %v157, %v158
    %v160 = vrot.slane %v139, 2
    %v161 = vrot.slane %v138, 2
    %v162 = vsel %vm148, %v160, %v161
    %v163 = vrot.slane %v147, 2
    %v164 = vsel %vm148, %v163, %v163
    %v171 = vld [vmem:[#allocation7] sm:$0xf]
    %v172 = vld [vmem:[#allocation7 + $0x4] sm:$0xf]
    %v173 = vld [vmem:[#allocation7 + $0x8] sm:$0xf]
    %v174 = vld [vmem:[#allocation7 + $0xc] sm:$0xf]
    %v175 = vld [vmem:[#allocation7 + $0x10] sm:$0xf]
    %v176 = vld [vmem:[#allocation7 + $0x14] sm:$0xf]
    %v177 = vld [vmem:[#allocation7 + $0x18] sm:$0xf]
    %v178 = vld [vmem:[#allocation7 + $0x1c] sm:$0xf]
    %v179 = vld [vmem:[#allocation7 + $0x20] sm:$0xf]
    %v180 = vld [vmem:[#allocation7 + $0x24] sm:$0xf]
    %v181 = vld [vmem:[#allocation7 + $0x28] sm:$0xf]
    %v182 = vld [vmem:[#allocation7 + $0x2c] sm:$0xf]
    %v183 = vld [vmem:[#allocation7 + $0x30] sm:$0xf]
    %v184 = vld [vmem:[#allocation7 + $0x34] sm:$0xf]
    %v185 = vld [vmem:[#allocation7 + $0x38] sm:$0xf]
    %v186 = vld [vmem:[#allocation7 + $0x3c] sm:$0xf]
    %v187 = vld [vmem:[#allocation7 + $0x40] sm:$0xf]
    %v188 = vld [vmem:[#allocation7 + $0x44] sm:$0xf]
    %v189 = vld [vmem:[#allocation7 + $0x48] sm:$0xf]
    %v190 = vld [vmem:[#allocation7 + $0x4c] sm:$0xf]
    %v191 = vld [vmem:[#allocation7 + $0x50] sm:$0xf]
    %v192 = vld [vmem:[#allocation7 + $0x54] sm:$0xf]
    %v193 = vld [vmem:[#allocation7 + $0x58] sm:$0xf]
    %v194 = vld [vmem:[#allocation7 + $0x5c] sm:$0xf]
    %v195 = vld [vmem:[#allocation7 + $0x60] sm:$0xf]
    %v196 = vld [vmem:[#allocation7 + $0x64] sm:$0xf]
    %v197 = vld [vmem:[#allocation7 + $0x68] sm:$0xf]
    %v198 = vld [vmem:[#allocation7 + $0x6c] sm:$0xf]
    %v199 = vld [vmem:[#allocation7 + $0x70] sm:$0xf]
    %v200 = vld [vmem:[#allocation7 + $0x74] sm:$0xf]
    %v201 = vld [vmem:[#allocation7 + $0x78] sm:$0xf]
    %v202 = vld [vmem:[#allocation7 + $0x7c] sm:$0xf]
    %v203 = vld [vmem:[#allocation7 + $0x80] sm:$0xf]
    %v204 = vld [vmem:[#allocation7 + $0x84] sm:$0xf]
    %v205 = vld [vmem:[#allocation7 + $0x88] sm:$0xf]
    %v206 = vld [vmem:[#allocation7 + $0x8c] sm:$0xf]
    %v207 = vld [vmem:[#allocation7 + $0x90] sm:$0xf]
    %v208 = vld [vmem:[#allocation7 + $0x94] sm:$0xf]
    %v209 = vld [vmem:[#allocation7 + $0x98] sm:$0xf]
    %v210 = vld [vmem:[#allocation7 + $0x9c] sm:$0xf]
    %v211 = vld [vmem:[#allocation7 + $0xa0] sm:$0xf]
    %v212 = vld [vmem:[#allocation7 + $0xa4] sm:$0xf]
    %v213 = vld [vmem:[#allocation7 + $0xa8] sm:$0xf]
    %v214 = vld [vmem:[#allocation7 + $0xac] sm:$0xf]
    %v215 = vld [vmem:[#allocation7 + $0xb0] sm:$0xf]
    %v216 = vld [vmem:[#allocation7 + $0xb4] sm:$0xf]
    %v217 = vld [vmem:[#allocation7 + $0xb8] sm:$0xf]
    %v218 = vld [vmem:[#allocation7 + $0xbc] sm:$0xf]
    %v219 = vld [vmem:[%s2] sm:$0x1]
    %v221 = vlaneseq
    %v222 = vshrl.u32 %v221, 7
    %v223 = vsub.s32 0, %v222
    %v224 = vrot.slane %v219, %v223
    %v274 = vunpack.c.l.b16 %v171
    %v275 = vunpack.c.l.b16 %v172
    %v276 = vunpack.c.l.b16 %v173
    %v277 = vunpack.c.l.b16 %v174
    %v278 = vunpack.c.l.b16 %v175
    %v279 = vunpack.c.l.b16 %v176
    %v280 = vunpack.c.l.b16 %v177
    %v281 = vunpack.c.l.b16 %v178
    %v282 = vunpack.c.l.b16 %v179
    %v283 = vunpack.c.l.b16 %v180
    %v284 = vunpack.c.l.b16 %v181
    %v285 = vunpack.c.l.b16 %v182
    %v286 = vunpack.c.l.b16 %v183
    %v287 = vunpack.c.l.b16 %v184
    %v288 = vunpack.c.l.b16 %v185
    %v289 = vunpack.c.l.b16 %v186
    %v290 = vunpack.c.l.b16 %v187
    %v291 = vunpack.c.l.b16 %v188
    %v292 = vunpack.c.l.b16 %v189
    %v293 = vunpack.c.l.b16 %v190
    %v294 = vunpack.c.l.b16 %v191
    %v295 = vunpack.c.l.b16 %v192
    %v296 = vunpack.c.l.b16 %v193
    %v297 = vunpack.c.l.b16 %v194
    %v298 = vunpack.c.l.b16 %v195
    %v299 = vunpack.c.l.b16 %v196
    %v300 = vunpack.c.l.b16 %v197
    %v301 = vunpack.c.l.b16 %v198
    %v302 = vunpack.c.l.b16 %v199
    %v303 = vunpack.c.l.b16 %v200
    %v304 = vunpack.c.l.b16 %v201
    %v305 = vunpack.c.l.b16 %v202
    %v306 = vunpack.c.l.b16 %v203
    %v307 = vunpack.c.l.b16 %v204
    %v308 = vunpack.c.l.b16 %v205
    %v309 = vunpack.c.l.b16 %v206
    %v310 = vunpack.c.l.b16 %v207
    %v311 = vunpack.c.l.b16 %v208
    %v312 = vunpack.c.l.b16 %v209
    %v313 = vunpack.c.l.b16 %v210
    %v314 = vunpack.c.l.b16 %v211
    %v315 = vunpack.c.l.b16 %v212
    %v316 = vunpack.c.l.b16 %v213
    %v317 = vunpack.c.l.b16 %v214
    %v318 = vunpack.c.l.b16 %v215
    %v319 = vunpack.c.l.b16 %v216
    %v320 = vunpack.c.l.b16 %v217
    %v321 = vunpack.c.l.b16 %v218
    %v322 = vpack.c.b16 %v275, %v274
    %v323 = vpack.c.b16 %v277, %v276
    %v324 = vpack.c.b16 %v279, %v278
    %v325 = vpack.c.b16 %v281, %v280
    %v326 = vpack.c.b16 %v283, %v282
    %v327 = vpack.c.b16 %v285, %v284
    %v328 = vpack.c.b16 %v287, %v286
    %v329 = vpack.c.b16 %v289, %v288
    %v330 = vpack.c.b16 %v291, %v290
    %v331 = vpack.c.b16 %v293, %v292
    %v332 = vpack.c.b16 %v295, %v294
    %v333 = vpack.c.b16 %v297, %v296
    %v334 = vpack.c.b16 %v299, %v298
    %v335 = vpack.c.b16 %v301, %v300
    %v336 = vpack.c.b16 %v303, %v302
    %v337 = vpack.c.b16 %v305, %v304
    %v338 = vpack.c.b16 %v307, %v306
    %v339 = vpack.c.b16 %v309, %v308
    %v340 = vpack.c.b16 %v311, %v310
    %v341 = vpack.c.b16 %v313, %v312
    %v342 = vpack.c.b16 %v315, %v314
    %v343 = vpack.c.b16 %v317, %v316
    %v344 = vpack.c.b16 %v319, %v318
    %v345 = vpack.c.b16 %v321, %v320
    %370 = vmatprep.subr.bf16.mxu0 0
    %371 = vmatpush1.bf16.msra.mxu0 %v322
    %372 = vmatprep.subr.bf16.mxu0 0
    %373 = vmatpush1.bf16.msra.mxu0 %v323
    %374 = vmatprep.subr.bf16.mxu0 0
    %375 = vmatpush1.bf16.msra.mxu0 %v324
    %376 = vmatprep.subr.bf16.mxu0 0
    %377 = vmatpush1.bf16.msra.mxu0 %v325
    %378 = vmatprep.subr.bf16.mxu0 0
    %379 = vmatpush1.bf16.msra.mxu0 %v326
    %380 = vmatprep.subr.bf16.mxu0 0
    %381 = vmatpush1.bf16.msra.mxu0 %v327
    %382 = vmatprep.subr.bf16.mxu0 0
    %383 = vmatpush1.bf16.msra.mxu0 %v328
    %384 = vmatprep.subr.bf16.mxu0 0
    %385 = vmatpush1.bf16.msra.mxu0 %v329
    %386 = vmatprep.subr.bf16.mxu0 0
    %387 = vmatpush1.bf16.msra.mxu0 %v330
    %388 = vmatprep.subr.bf16.mxu0 0
    %389 = vmatpush1.bf16.msra.mxu0 %v331
    %390 = vmatprep.subr.bf16.mxu0 0
    %391 = vmatpush1.bf16.msra.mxu0 %v332
    %392 = vmatprep.subr.bf16.mxu0 0
    %393 = vmatpush1.bf16.msra.mxu0 %v333
    %394 = vmatprep.subr.bf16.mxu0 0
    %395 = vmatpush1.bf16.msra.mxu0 %v334
    %396 = vmatprep.subr.bf16.mxu0 0
    %397 = vmatpush1.bf16.msra.mxu0 %v335
    %398 = vmatprep.subr.bf16.mxu0 0
    %399 = vmatpush1.bf16.msra.mxu0 %v336
    %400 = vmatprep.subr.bf16.mxu0 0
    %401 = vmatpush1.bf16.msra.mxu0 %v337
    %402 = vmatprep.mubr.bf16.mxu0 %v154
    %403 = vmatmul.mubr.bf16.gmra.mrb[0].mxu0 %v151
    %v404 = vpop.f32.mrb[0].mxu0
    %v405 = vadd.f32 %v224, %v404
    %v406 = vpop.f32.mrb[0].mxu0
    %v407 = vpop.f32.mrb[0].mxu0
    %v408 = vadd.f32 %v224, %v407
    %v409 = vpop.f32.mrb[0].mxu0
    %410 = vmatprep.mubr.bf16.mxu0 %v162
    %411 = vmatmul.mubr.bf16.gmra.mrb[0].mxu0 %v159
    %v412 = vpop.f32.mrb[0].mxu0
    %v413 = vadd.f32 %v224, %v412
    %v414 = vpop.f32.mrb[0].mxu0
    %v415 = vpop.f32.mrb[0].mxu0
    %v416 = vadd.f32 %v224, %v415
    %v417 = vpop.f32.mrb[0].mxu0
    %418 = vdwg.mxu0
    %419 = vmatprep.subr.bf16.mxu0 0
    %420 = vmatpush1.bf16.msra.mxu0 %v338
    %421 = vmatprep.subr.bf16.mxu0 0
    %422 = vmatpush1.bf16.msra.mxu0 %v339
    %423 = vmatprep.subr.bf16.mxu0 0
    %424 = vmatpush1.bf16.msra.mxu0 %v340
    %425 = vmatprep.subr.bf16.mxu0 0
    %426 = vmatpush1.bf16.msra.mxu0 %v341
    %427 = vmatprep.subr.bf16.mxu0 0
    %428 = vmatpush1.bf16.msra.mxu0 %v342
    %429 = vmatprep.subr.bf16.mxu0 0
    %430 = vmatpush1.bf16.msra.mxu0 %v343
    %431 = vmatprep.subr.bf16.mxu0 0
    %432 = vmatpush1.bf16.msra.mxu0 %v344
    %433 = vmatprep.subr.bf16.mxu0 0
    %434 = vmatpush1.bf16.msra.mxu0 %v345
    %435 = vmatprep.subr.bf16.mxu0 0
    %436 = vmatpush1.bf16.msra.mxu0 0
    %437 = vmatprep.subr.bf16.mxu0 0
    %438 = vmatpush1.bf16.msra.mxu0 0
    %439 = vmatprep.subr.bf16.mxu0 0
    %440 = vmatpush1.bf16.msra.mxu0 0
    %441 = vmatprep.subr.bf16.mxu0 0
    %442 = vmatpush1.bf16.msra.mxu0 0
    %443 = vmatprep.subr.bf16.mxu0 0
    %444 = vmatpush1.bf16.msra.mxu0 0
    %445 = vmatprep.subr.bf16.mxu0 0
    %446 = vmatpush1.bf16.msra.mxu0 0
    %447 = vmatprep.subr.bf16.mxu0 0
    %448 = vmatpush1.bf16.msra.mxu0 0
    %449 = vmatprep.subr.bf16.mxu0 0
    %450 = vmatpush1.bf16.msra.mxu0 0
    %451 = vmatprep.mubr.bf16.mxu0 0
    %452 = vmatmul.mubr.bf16.gmra.mrb[0].mxu0 %v156
    %v453 = vpop.f32.mrb[0].mxu0
    %v454 = vadd.f32 %v405, %v453
    %v455 = vpop.f32.mrb[0].mxu0
    %v456 = vpop.f32.mrb[0].mxu0
    %v457 = vadd.f32 %v408, %v456
    %v458 = vpop.f32.mrb[0].mxu0
    %459 = vmatprep.mubr.bf16.mxu0 0
    %460 = vmatmul.mubr.bf16.gmra.mrb[0].mxu0 %v164
    %v461 = vpop.f32.mrb[0].mxu0
    %v462 = vadd.f32 %v413, %v461
    %v463 = vpop.f32.mrb[0].mxu0
    %v464 = vpop.f32.mrb[0].mxu0
    %v465 = vadd.f32 %v416, %v464
    %v466 = vpop.f32.mrb[0].mxu0
    %467 = vdwg.mxu0
    %v468 = vmax.f32 %v454, 0.0
    %v469 = vmax.f32 %v457, 0.0
    %v470 = vmax.f32 %v462, 0.0
    %v471 = vmax.f32 %v465, 0.0
    %472 = vst [vmem:[#allocation3] sm:$0xf] 0
    %473 = vst [vmem:[#allocation3 + $0xc] sm:$0xf] 0
    %v474 = vpack.c.bf16 %v469, %v468
    %v475 = vpack.c.bf16 %v471, %v470
    %v478 = vunpack.c.l.b16 %v474
    %v479 = vunpack.c.h.b16 %v474
    %v480 = vunpack.c.l.b16 %v475
    %v481 = vunpack.c.h.b16 %v475
    %v482 = vpack.c.b16 %v478, %v478
    %v483 = vpack.c.b16 %v479, %v479
    %v484 = vpack.c.b16 %v480, %v480
    %v485 = vpack.c.b16 %v481, %v481
    %490 = vst [vmem:[#allocation3 + $0x4] sm:$0xf] %v482
    %491 = vst [vmem:[#allocation3 + $0x8] sm:$0xf] %v483
    %492 = vst [vmem:[#allocation3 + $0x10] sm:$0xf] %v484
    %493 = vst [vmem:[#allocation3 + $0x14] sm:$0xf] %v485
    %v494 = vld [vmem:[#allocation3] sm:$0xc]
    %v495 = vld [vmem:[#allocation3 + $0x4] sm:$0xf]
    %v496 = vld [vmem:[#allocation3 + $0x8] sm:$0x3]
    %v497 = vld [vmem:[#allocation3 + $0xc] sm:$0xc]
    %v498 = vld [vmem:[#allocation3 + $0x10] sm:$0xf]
    %v499 = vld [vmem:[#allocation3 + $0x14] sm:$0x3]
    %v500 = vld [vmem:[#allocation3] sm:$0x8]
    %v501 = vld [vmem:[#allocation3 + $0x8] sm:$0x7]
    %v502 = vld [vmem:[#allocation3 + $0xc] sm:$0x8]
    %v503 = vld [vmem:[#allocation3 + $0x14] sm:$0x7]
    %v504 = vld [vmem:[#allocation3 + $0x8] sm:$0xf]
    %v505 = vld [vmem:[#allocation3 + $0x14] sm:$0xf]
    %v512 = vunpack.c.l.b16 %v494
    %v513 = vunpack.c.l.b16 %v495
    %v514 = vunpack.c.l.b16 %v496
    %v515 = vunpack.c.l.b16 %v497
    %v516 = vunpack.c.l.b16 %v498
    %v517 = vunpack.c.l.b16 %v499
    %v518 = vpack.c.b16 %v513, %v512
    %v519 = vpack.c.b16 %v514, %v514
    %v520 = vpack.c.b16 %v516, %v515
    %v521 = vpack.c.b16 %v517, %v517
    %v526 = vunpack.c.l.b16 %v500
    %v527 = vunpack.c.l.b16 %v501
    %v528 = vunpack.c.l.b16 %v502
    %v529 = vunpack.c.l.b16 %v503
    %v530 = vpack.c.b16 %v513, %v526
    %v531 = vpack.c.b16 %v527, %v527
    %v532 = vpack.c.b16 %v516, %v528
    %v533 = vpack.c.b16 %v529, %v529
    %v534 = vrot.slane %v530, 1
    %v535 = vrot.slane %v531, 1
    %v536 = vsel %vm133, %v534, %v535
    %v537 = vrot.slane %v532, 1
    %v538 = vrot.slane %v533, 1
    %v539 = vsel %vm133, %v537, %v538
    %v542 = vunpack.c.l.b16 %v504
    %v543 = vunpack.c.l.b16 %v505
    %v544 = vpack.c.b16 %v542, %v513
    %v545 = vpack.c.b16 %v543, %v516
    %v546 = vrot.slane %v544, 6
    %v547 = vrot.slane %v545, 6
    %v548 = vrot.slane %v518, 2
    %v549 = vrot.slane %v519, 2
    %v550 = vsel %vm148, %v548, %v549
    %v551 = vrot.slane %v536, 2
    %v552 = vrot.slane %v535, 2
    %v553 = vsel %vm148, %v551, %v552
    %v554 = vrot.slane %v546, 2
    %v555 = vsel %vm148, %v554, %v554
    %v556 = vrot.slane %v520, 2
    %v557 = vrot.slane %v521, 2
    %v558 = vsel %vm148, %v556, %v557
    %v559 = vrot.slane %v539, 2
    %v560 = vrot.slane %v538, 2
    %v561 = vsel %vm148, %v559, %v560
    %v562 = vrot.slane %v547, 2
    %v563 = vsel %vm148, %v562, %v562
    %v570 = vld [vmem:[#allocation9] sm:$0xf]
    %v571 = vld [vmem:[#allocation9 + $0x4] sm:$0xf]
    %v572 = vld [vmem:[#allocation9 + $0x8] sm:$0xf]
    %v573 = vld [vmem:[#allocation9 + $0xc] sm:$0xf]
    %v574 = vld [vmem:[#allocation9 + $0x10] sm:$0xf]
    %v575 = vld [vmem:[#allocation9 + $0x14] sm:$0xf]
    %v576 = vld [vmem:[#allocation9 + $0x18] sm:$0xf]
    %v577 = vld [vmem:[#allocation9 + $0x1c] sm:$0xf]
    %v578 = vld [vmem:[#allocation9 + $0x20] sm:$0xf]
    %v579 = vld [vmem:[#allocation9 + $0x24] sm:$0xf]
    %v580 = vld [vmem:[#allocation9 + $0x28] sm:$0xf]
    %v581 = vld [vmem:[#allocation9 + $0x2c] sm:$0xf]
    %v582 = vld [vmem:[#allocation9 + $0x30] sm:$0xf]
    %v583 = vld [vmem:[#allocation9 + $0x34] sm:$0xf]
    %v584 = vld [vmem:[#allocation9 + $0x38] sm:$0xf]
    %v585 = vld [vmem:[#allocation9 + $0x3c] sm:$0xf]
    %v586 = vld [vmem:[#allocation9 + $0x40] sm:$0xf]
    %v587 = vld [vmem:[#allocation9 + $0x44] sm:$0xf]
    %v588 = vld [vmem:[#allocation9 + $0x48] sm:$0xf]
    %v589 = vld [vmem:[#allocation9 + $0x4c] sm:$0xf]
    %v590 = vld [vmem:[#allocation9 + $0x50] sm:$0xf]
    %v591 = vld [vmem:[#allocation9 + $0x54] sm:$0xf]
    %v592 = vld [vmem:[#allocation9 + $0x58] sm:$0xf]
    %v593 = vld [vmem:[#allocation9 + $0x5c] sm:$0xf]
    %v594 = vld [vmem:[#allocation9 + $0x60] sm:$0xf]
    %v595 = vld [vmem:[#allocation9 + $0x64] sm:$0xf]
    %v596 = vld [vmem:[#allocation9 + $0x68] sm:$0xf]
    %v597 = vld [vmem:[#allocation9 + $0x6c] sm:$0xf]
    %v598 = vld [vmem:[#allocation9 + $0x70] sm:$0xf]
    %v599 = vld [vmem:[#allocation9 + $0x74] sm:$0xf]
    %v600 = vld [vmem:[#allocation9 + $0x78] sm:$0xf]
    %v601 = vld [vmem:[#allocation9 + $0x7c] sm:$0xf]
    %v602 = vld [vmem:[#allocation9 + $0x80] sm:$0xf]
    %v603 = vld [vmem:[#allocation9 + $0x84] sm:$0xf]
    %v604 = vld [vmem:[#allocation9 + $0x88] sm:$0xf]
    %v605 = vld [vmem:[#allocation9 + $0x8c] sm:$0xf]
    %v606 = vld [vmem:[#allocation9 + $0x90] sm:$0xf]
    %v607 = vld [vmem:[#allocation9 + $0x94] sm:$0xf]
    %v608 = vld [vmem:[#allocation9 + $0x98] sm:$0xf]
    %v609 = vld [vmem:[#allocation9 + $0x9c] sm:$0xf]
    %v610 = vld [vmem:[#allocation9 + $0xa0] sm:$0xf]
    %v611 = vld [vmem:[#allocation9 + $0xa4] sm:$0xf]
    %v612 = vld [vmem:[#allocation9 + $0xa8] sm:$0xf]
    %v613 = vld [vmem:[#allocation9 + $0xac] sm:$0xf]
    %v614 = vld [vmem:[#allocation9 + $0xb0] sm:$0xf]
    %v615 = vld [vmem:[#allocation9 + $0xb4] sm:$0xf]
    %v616 = vld [vmem:[#allocation9 + $0xb8] sm:$0xf]
    %v617 = vld [vmem:[#allocation9 + $0xbc] sm:$0xf]
    %v618 = vld [vmem:[%s4] sm:$0x1]
    %v620 = vlaneseq
    %v621 = vshrl.u32 %v620, 7
    %v622 = vsub.s32 0, %v621
    %v623 = vrot.slane %v618, %v622
    %v673 = vunpack.c.l.b16 %v570
    %v674 = vunpack.c.l.b16 %v571
    %v675 = vunpack.c.l.b16 %v572
    %v676 = vunpack.c.l.b16 %v573
    %v677 = vunpack.c.l.b16 %v574
    %v678 = vunpack.c.l.b16 %v575
    %v679 = vunpack.c.l.b16 %v576
    %v680 = vunpack.c.l.b16 %v577
    %v681 = vunpack.c.l.b16 %v578
    %v682 = vunpack.c.l.b16 %v579
    %v683 = vunpack.c.l.b16 %v580
    %v684 = vunpack.c.l.b16 %v581
    %v685 = vunpack.c.l.b16 %v582
    %v686 = vunpack.c.l.b16 %v583
    %v687 = vunpack.c.l.b16 %v584
    %v688 = vunpack.c.l.b16 %v585
    %v689 = vunpack.c.l.b16 %v586
    %v690 = vunpack.c.l.b16 %v587
    %v691 = vunpack.c.l.b16 %v588
    %v692 = vunpack.c.l.b16 %v589
    %v693 = vunpack.c.l.b16 %v590
    %v694 = vunpack.c.l.b16 %v591
    %v695 = vunpack.c.l.b16 %v592
    %v696 = vunpack.c.l.b16 %v593
    %v697 = vunpack.c.l.b16 %v594
    %v698 = vunpack.c.l.b16 %v595
    %v699 = vunpack.c.l.b16 %v596
    %v700 = vunpack.c.l.b16 %v597
    %v701 = vunpack.c.l.b16 %v598
    %v702 = vunpack.c.l.b16 %v599
    %v703 = vunpack.c.l.b16 %v600
    %v704 = vunpack.c.l.b16 %v601
    %v705 = vunpack.c.l.b16 %v602
    %v706 = vunpack.c.l.b16 %v603
    %v707 = vunpack.c.l.b16 %v604
    %v708 = vunpack.c.l.b16 %v605
    %v709 = vunpack.c.l.b16 %v606
    %v710 = vunpack.c.l.b16 %v607
    %v711 = vunpack.c.l.b16 %v608
    %v712 = vunpack.c.l.b16 %v609
    %v713 = vunpack.c.l.b16 %v610
    %v714 = vunpack.c.l.b16 %v611
    %v715 = vunpack.c.l.b16 %v612
    %v716 = vunpack.c.l.b16 %v613
    %v717 = vunpack.c.l.b16 %v614
    %v718 = vunpack.c.l.b16 %v615
    %v719 = vunpack.c.l.b16 %v616
    %v720 = vunpack.c.l.b16 %v617
    %v721 = vpack.c.b16 %v674, %v673
    %v722 = vpack.c.b16 %v676, %v675
    %v723 = vpack.c.b16 %v678, %v677
    %v724 = vpack.c.b16 %v680, %v679
    %v725 = vpack.c.b16 %v682, %v681
    %v726 = vpack.c.b16 %v684, %v683
    %v727 = vpack.c.b16 %v686, %v685
    %v728 = vpack.c.b16 %v688, %v687
    %v729 = vpack.c.b16 %v690, %v689
    %v730 = vpack.c.b16 %v692, %v691
    %v731 = vpack.c.b16 %v694, %v693
    %v732 = vpack.c.b16 %v696, %v695
    %v733 = vpack.c.b16 %v698, %v697
    %v734 = vpack.c.b16 %v700, %v699
    %v735 = vpack.c.b16 %v702, %v701
    %v736 = vpack.c.b16 %v704, %v703
    %v737 = vpack.c.b16 %v706, %v705
    %v738 = vpack.c.b16 %v708, %v707
    %v739 = vpack.c.b16 %v710, %v709
    %v740 = vpack.c.b16 %v712, %v711
    %v741 = vpack.c.b16 %v714, %v713
    %v742 = vpack.c.b16 %v716, %v715
    %v743 = vpack.c.b16 %v718, %v717
    %v744 = vpack.c.b16 %v720, %v719
    %769 = vmatprep.subr.bf16.mxu0 0
    %770 = vmatpush1.bf16.msra.mxu0 %v721
    %771 = vmatprep.subr.bf16.mxu0 0
    %772 = vmatpush1.bf16.msra.mxu0 %v722
    %773 = vmatprep.subr.bf16.mxu0 0
    %774 = vmatpush1.bf16.msra.mxu0 %v723
    %775 = vmatprep.subr.bf16.mxu0 0
    %776 = vmatpush1.bf16.msra.mxu0 %v724
    %777 = vmatprep.subr.bf16.mxu0 0
    %778 = vmatpush1.bf16.msra.mxu0 %v725
    %779 = vmatprep.subr.bf16.mxu0 0
    %780 = vmatpush1.bf16.msra.mxu0 %v726
    %781 = vmatprep.subr.bf16.mxu0 0
    %782 = vmatpush1.bf16.msra.mxu0 %v727
    %783 = vmatprep.subr.bf16.mxu0 0
    %784 = vmatpush1.bf16.msra.mxu0 %v728
    %785 = vmatprep.subr.bf16.mxu0 0
    %786 = vmatpush1.bf16.msra.mxu0 %v729
    %787 = vmatprep.subr.bf16.mxu0 0
    %788 = vmatpush1.bf16.msra.mxu0 %v730
    %789 = vmatprep.subr.bf16.mxu0 0
    %790 = vmatpush1.bf16.msra.mxu0 %v731
    %791 = vmatprep.subr.bf16.mxu0 0
    %792 = vmatpush1.bf16.msra.mxu0 %v732
    %793 = vmatprep.subr.bf16.mxu0 0
    %794 = vmatpush1.bf16.msra.mxu0 %v733
    %795 = vmatprep.subr.bf16.mxu0 0
    %796 = vmatpush1.bf16.msra.mxu0 %v734
    %797 = vmatprep.subr.bf16.mxu0 0
    %798 = vmatpush1.bf16.msra.mxu0 %v735
    %799 = vmatprep.subr.bf16.mxu0 0
    %800 = vmatpush1.bf16.msra.mxu0 %v736
    %801 = vmatprep.mubr.bf16.mxu0 %v553
    %802 = vmatmul.mubr.bf16.gmra.mrb[0].mxu0 %v550
    %v803 = vpop.f32.mrb[0].mxu0
    %v804 = vadd.f32 %v623, %v803
    %v805 = vpop.f32.mrb[0].mxu0
    %v806 = vpop.f32.mrb[0].mxu0
    %v807 = vadd.f32 %v623, %v806
    %v808 = vpop.f32.mrb[0].mxu0
    %809 = vmatprep.mubr.bf16.mxu0 %v561
    %810 = vmatmul.mubr.bf16.gmra.mrb[0].mxu0 %v558
    %v811 = vpop.f32.mrb[0].mxu0
    %v812 = vadd.f32 %v623, %v811
    %v813 = vpop.f32.mrb[0].mxu0
    %v814 = vpop.f32.mrb[0].mxu0
    %v815 = vadd.f32 %v623, %v814
    %v816 = vpop.f32.mrb[0].mxu0
    %817 = vdwg.mxu0
    %818 = vmatprep.subr.bf16.mxu0 0
    %819 = vmatpush1.bf16.msra.mxu0 %v737
    %820 = vmatprep.subr.bf16.mxu0 0
    %821 = vmatpush1.bf16.msra.mxu0 %v738
    %822 = vmatprep.subr.bf16.mxu0 0
    %823 = vmatpush1.bf16.msra.mxu0 %v739
    %824 = vmatprep.subr.bf16.mxu0 0
    %825 = vmatpush1.bf16.msra.mxu0 %v740
    %826 = vmatprep.subr.bf16.mxu0 0
    %827 = vmatpush1.bf16.msra.mxu0 %v741
    %828 = vmatprep.subr.bf16.mxu0 0
    %829 = vmatpush1.bf16.msra.mxu0 %v742
    %830 = vmatprep.subr.bf16.mxu0 0
    %831 = vmatpush1.bf16.msra.mxu0 %v743
    %832 = vmatprep.subr.bf16.mxu0 0
    %833 = vmatpush1.bf16.msra.mxu0 %v744
    %834 = vmatprep.subr.bf16.mxu0 0
    %835 = vmatpush1.bf16.msra.mxu0 0
    %836 = vmatprep.subr.bf16.mxu0 0
    %837 = vmatpush1.bf16.msra.mxu0 0
    %838 = vmatprep.subr.bf16.mxu0 0
    %839 = vmatpush1.bf16.msra.mxu0 0
    %840 = vmatprep.subr.bf16.mxu0 0
    %841 = vmatpush1.bf16.msra.mxu0 0
    %842 = vmatprep.subr.bf16.mxu0 0
    %843 = vmatpush1.bf16.msra.mxu0 0
    %844 = vmatprep.subr.bf16.mxu0 0
    %845 = vmatpush1.bf16.msra.mxu0 0
    %846 = vmatprep.subr.bf16.mxu0 0
    %847 = vmatpush1.bf16.msra.mxu0 0
    %848 = vmatprep.subr.bf16.mxu0 0
    %849 = vmatpush1.bf16.msra.mxu0 0
    %850 = vmatprep.mubr.bf16.mxu0 0
    %851 = vmatmul.mubr.bf16.gmra.mrb[0].mxu0 %v555
    %v852 = vpop.f32.mrb[0].mxu0
    %v853 = vadd.f32 %v804, %v852
    %v854 = vpop.f32.mrb[0].mxu0
    %v855 = vpop.f32.mrb[0].mxu0
    %v856 = vadd.f32 %v807, %v855
    %v857 = vpop.f32.mrb[0].mxu0
    %858 = vmatprep.mubr.bf16.mxu0 0
    %859 = vmatmul.mubr.bf16.gmra.mrb[0].mxu0 %v563
    %v860 = vpop.f32.mrb[0].mxu0
    %v861 = vadd.f32 %v812, %v860
    %v862 = vpop.f32.mrb[0].mxu0
    %v863 = vpop.f32.mrb[0].mxu0
    %v864 = vadd.f32 %v815, %v863
    %v865 = vpop.f32.mrb[0].mxu0
    %866 = vdwg.mxu0
    %v867 = vmax.f32 %v853, 0.0
    %v868 = vmax.f32 %v856, 0.0
    %v869 = vmax.f32 %v861, 0.0
    %v870 = vmax.f32 %v864, 0.0
    %v871 = vld [vmem:[#allocation4] sm:$0xf]
    %v872 = vld [vmem:[#allocation4 + $0x4] sm:$0xf]
    %v873 = vld [vmem:[#allocation4 + $0x8] sm:$0xf]
    %v874 = vld [vmem:[#allocation4 + $0xc] sm:$0xf]
    %v875 = vld [vmem:[#allocation10] sm:$0xf]
    %v876 = vld [vmem:[#allocation10 + $0x4] sm:$0xf]
    %v877 = vld [vmem:[#allocation10 + $0x8] sm:$0xf]
    %v878 = vld [vmem:[#allocation10 + $0xc] sm:$0xf]
    %v879 = vld [vmem:[#allocation10 + $0x10] sm:$0xf]
    %v880 = vld [vmem:[#allocation10 + $0x14] sm:$0xf]
    %v881 = vld [vmem:[#allocation10 + $0x18] sm:$0xf]
    %v882 = vld [vmem:[#allocation10 + $0x1c] sm:$0xf]
    %v883 = vld [vmem:[#allocation10 + $0x20] sm:$0xf]
    %v884 = vld [vmem:[#allocation10 + $0x24] sm:$0xf]
    %v885 = vld [vmem:[#allocation10 + $0x28] sm:$0xf]
    %v886 = vld [vmem:[#allocation10 + $0x2c] sm:$0xf]
    %v887 = vld [vmem:[#allocation10 + $0x30] sm:$0xf]
    %v888 = vld [vmem:[#allocation10 + $0x34] sm:$0xf]
    %v889 = vld [vmem:[#allocation10 + $0x38] sm:$0xf]
    %v890 = vld [vmem:[#allocation10 + $0x3c] sm:$0xf]
    %v891 = vld [vmem:[%s6] sm:$0x1]
    %v893 = vlaneseq
    %v894 = vshrl.u32 %v893, 7
    %v895 = vsub.s32 0, %v894
    %v896 = vrot.slane %v891, %v895
    %v902 = vunpack.c.l.b16 %v871
    %v903 = vunpack.c.l.b16 %v872
    %v904 = vunpack.c.l.b16 %v873
    %v905 = vunpack.c.l.b16 %v874
    %v906 = vpack.c.b16 %v903, %v902
    %v907 = vpack.c.b16 %v905, %v904
    %v926 = vunpack.c.l.b16 %v875
    %v927 = vunpack.c.l.b16 %v876
    %v928 = vunpack.c.l.b16 %v877
    %v929 = vunpack.c.l.b16 %v878
    %v930 = vunpack.c.l.b16 %v879
    %v931 = vunpack.c.l.b16 %v880
    %v932 = vunpack.c.l.b16 %v881
    %v933 = vunpack.c.l.b16 %v882
    %v934 = vunpack.c.l.b16 %v883
    %v935 = vunpack.c.l.b16 %v884
    %v936 = vunpack.c.l.b16 %v885
    %v937 = vunpack.c.l.b16 %v886
    %v938 = vunpack.c.l.b16 %v887
    %v939 = vunpack.c.l.b16 %v888
    %v940 = vunpack.c.l.b16 %v889
    %v941 = vunpack.c.l.b16 %v890
    %v942 = vpack.c.b16 %v927, %v926
    %v943 = vpack.c.b16 %v929, %v928
    %v944 = vpack.c.b16 %v931, %v930
    %v945 = vpack.c.b16 %v933, %v932
    %v946 = vpack.c.b16 %v935, %v934
    %v947 = vpack.c.b16 %v937, %v936
    %v948 = vpack.c.b16 %v939, %v938
    %v949 = vpack.c.b16 %v941, %v940
    %958 = vmatprep.subr.bf16.mxu0 0
    %959 = vmatpush1.bf16.msra.mxu0 %v942
    %960 = vmatprep.subr.bf16.mxu0 0
    %961 = vmatpush1.bf16.msra.mxu0 %v943
    %962 = vmatprep.subr.bf16.mxu0 0
    %963 = vmatpush1.bf16.msra.mxu0 %v944
    %964 = vmatprep.subr.bf16.mxu0 0
    %965 = vmatpush1.bf16.msra.mxu0 %v945
    %966 = vmatprep.subr.bf16.mxu0 0
    %967 = vmatpush1.bf16.msra.mxu0 %v946
    %968 = vmatprep.subr.bf16.mxu0 0
    %969 = vmatpush1.bf16.msra.mxu0 %v947
    %970 = vmatprep.subr.bf16.mxu0 0
    %971 = vmatpush1.bf16.msra.mxu0 %v948
    %972 = vmatprep.subr.bf16.mxu0 0
    %973 = vmatpush1.bf16.msra.mxu0 %v949
    %974 = vmatprep.subr.bf16.mxu0 0
    %975 = vmatpush1.bf16.msra.mxu0 0
    %976 = vmatprep.subr.bf16.mxu0 0
    %977 = vmatpush1.bf16.msra.mxu0 0
    %978 = vmatprep.subr.bf16.mxu0 0
    %979 = vmatpush1.bf16.msra.mxu0 0
    %980 = vmatprep.subr.bf16.mxu0 0
    %981 = vmatpush1.bf16.msra.mxu0 0
    %982 = vmatprep.subr.bf16.mxu0 0
    %983 = vmatpush1.bf16.msra.mxu0 0
    %984 = vmatprep.subr.bf16.mxu0 0
    %985 = vmatpush1.bf16.msra.mxu0 0
    %986 = vmatprep.subr.bf16.mxu0 0
    %987 = vmatpush1.bf16.msra.mxu0 0
    %988 = vmatprep.subr.bf16.mxu0 0
    %989 = vmatpush1.bf16.msra.mxu0 0
    %990 = vmatprep.mubr.bf16.mxu0 0
    %991 = vmatmul.mubr.bf16.gmra.mrb[0].mxu0 %v906
    %v992 = vpop.f32.mrb[0].mxu0
    %v993 = vadd.f32 %v896, %v992
    %v994 = vpop.f32.mrb[0].mxu0
    %v995 = vpop.f32.mrb[0].mxu0
    %v996 = vadd.f32 %v896, %v995
    %v997 = vpop.f32.mrb[0].mxu0
    %998 = vmatprep.mubr.bf16.mxu0 0
    %999 = vmatmul.mubr.bf16.gmra.mrb[0].mxu0 %v907
    %v1000 = vpop.f32.mrb[0].mxu0
    %v1001 = vadd.f32 %v896, %v1000
    %v1002 = vpop.f32.mrb[0].mxu0
    %v1003 = vpop.f32.mrb[0].mxu0
    %v1004 = vadd.f32 %v896, %v1003
    %v1005 = vpop.f32.mrb[0].mxu0
    %1006 = vdwg.mxu0
    %v1007 = vadd.f32 %v867, %v993
    %v1008 = vadd.f32 %v868, %v996
    %v1009 = vadd.f32 %v869, %v1001
    %v1010 = vadd.f32 %v870, %v1004
    %v1011 = vmax.f32 %v1007, 0.0
    %v1012 = vmax.f32 %v1008, 0.0
    %v1013 = vmax.f32 %v1009, 0.0
    %v1014 = vmax.f32 %v1010, 0.0
    %1015 = vst [vmem:[#allocation12] sm:$0xff] %v1011
    %1016 = vst [vmem:[#allocation12 + $0x8] sm:$0xff] %v1012
    %1017 = vst [vmem:[#allocation12 + $0x10] sm:$0xff] %v1013
    %1018 = vst [vmem:[#allocation12 + $0x18] sm:$0xff] %v1014
    // Predicated region
    $region46: #{tpu_custom_call.1} parent=1 // pred_check
      _
    $region47: #{tpu_custom_call.1} parent=1 // pred_check_branch
      %1020 = sbr.rel (0) target = $region49
    $region48: #{tpu_custom_call.1} parent=1 // pred_region
      %s1022 = ssub.s32 512, 512
      %1023 = vsyncadd [#allocation6], %s1022
      %s1024 = sshll.u32 [#allocation12], 4
      %s1025 = int_to_ptr.vmem [resolvable:$true] %s1024
      %1030 = dma.vmem_to_hbm [thread:$0]  %s1025, 512, %s7, [#allocation6], 128, 128, 8
    $region49: #{tpu_custom_call.1} parent=1 // pred_fallthru
      _
    // Predicated region
    $region50: #{tpu_custom_call.1} parent=1 // pred_check
      _
    $region51: #{tpu_custom_call.1} parent=1 // pred_check_branch
      %1032 = sbr.rel (0) target = $region53
    $region52: #{tpu_custom_call.1} parent=1 // pred_region
      %1033 = dma.done [#allocation6], 512
    $region53: #{tpu_custom_call.1} parent=1 // pred_fallthru
      _
    %1034 = vsyncpa [#allocation5], 1
    %1035 = vsyncpa [#allocation8], 1
    %1036 = vsyncpa [#allocation11], 1
    %1037 = vsyncpa [#allocation6], 1

</llo_original>
